<compile_context>
chip_gen: v7x
topology: tpu7x:2x2x1
jax: 0.10.0
libtpu: 0.0.40
codegen_flags: <defaults>
</compile_context>

<pallas_src>
import functools
import math

import jax
import jax.numpy as jnp
from jax.experimental import pallas as pl
from jax.experimental.pallas import tpu as pltpu

EPS = 1e-7
LANES = 128
DEFAULT_TILE_ROWS = 8192               # packed rows per grid step (4 MiB f32 tile)
VMEM_LIMIT_BYTES = 48 * 1024 * 1024    # fits v7x's 64 MiB VMEM with headroom


def _round_up(x: int, m: int) -> int:
    return (x + m - 1) // m * m


# ---------------------------------------------------------------------------
# Packed kernel: each 128-lane row holds `pack = 128 // caps_dim` capsules.
# ---------------------------------------------------------------------------
def _caps_len_packed_kernel(x_ref, sel_ref, o_ref):
    # x_ref: (TILE_M, 128)   sel_ref: (128, pack)   o_ref: (TILE_M, pack)
    x = x_ref[...].astype(jnp.float32)
    sq = x * x                                        # VPU, exact in f32

    # Error-compensated split so the MXU reduction keeps ~f32 accuracy:
    # sq == hi + lo with hi/lo representable in bf16.
    hi = sq.astype(jnp.bfloat16)
    lo = (sq - hi.astype(jnp.float32)).astype(jnp.bfloat16)

    sel = sel_ref[...]                                # resident 0/1 selector
    acc = jnp.dot(hi, sel, preferred_element_type=jnp.float32)
    acc = acc + jnp.dot(lo, sel, preferred_element_type=jnp.float32)

    o_ref[...] = jnp.sqrt(acc + EPS).astype(o_ref.dtype)


# ---------------------------------------------------------------------------
# Fallback kernel: plain row tile, reduce over the (lane) last axis.
# ---------------------------------------------------------------------------
def _caps_len_rowtile_kernel(x_ref, o_ref):
    # x_ref: (TILE_R, D)   o_ref: (TILE_R, 1)
    x = x_ref[...].astype(jnp.float32)
    s = jnp.sum(x * x, axis=-1, keepdims=True)
    o_ref[...] = jnp.sqrt(s + EPS).astype(o_ref.dtype)


def caps_len(x: jax.Array, *, tile_rows: int = DEFAULT_TILE_ROWS) -> jax.Array:
    """sqrt(sum(x**2, axis=-1) + eps), computed in a Pallas TPU kernel."""
    assert x.ndim >= 1
    lead_shape = x.shape[:-1]
    D = x.shape[-1]
    R = math.prod(lead_shape) if lead_shape else 1
    out_dtype = x.dtype
    itemsize = jnp.dtype(x.dtype).itemsize

    cparams = pltpu.CompilerParams(
        dimension_semantics=("parallel",),
        vmem_limit_bytes=VMEM_LIMIT_BYTES,
    )

    if D <= LANES and LANES % D == 0:
        # ---- packed, lane-dense path -------------------------------------
        pack = LANES // D
        total = R * D
        flat = x.reshape(-1)                       # contiguous -> free view
        rem = total % LANES
        if rem:
            # Pad only to the next 128-element boundary (rare; <=127 zeros).
            flat = jnp.pad(flat, (0, LANES - rem))
        M = flat.shape[0] // LANES                 # packed 128-lane rows
        x2 = flat.reshape(M, LANES)

        # Tile: large enough to amortize per-step overhead, capped so the
        # parallel grid has >= 2 steps (v7x megacore) when possible.
        tile_m = min(tile_rows, max(8, _round_up(pl.cdiv(M, 2), 8)))
        grid = (pl.cdiv(M, tile_m),)               # ragged last block is fine

        # 0/1 block-diagonal selector: lane j -> capsule j // D.  Built once
        # on the host side and kept resident in VMEM (constant index_map).
        lane = jnp.arange(LANES, dtype=jnp.int32)[:, None]
        col = jnp.arange(pack, dtype=jnp.int32)[None, :]
        sel = (lane // D == col).astype(jnp.bfloat16)

        cost = pl.CostEstimate(
            flops=R * D + 4 * LANES * R,           # squares + two selector matmuls
            transcendentals=R,
            bytes_accessed=R * D * itemsize + R * itemsize,
        )

        out = pl.pallas_call(
            _caps_len_packed_kernel,
            out_shape=jax.ShapeDtypeStruct((M, pack), out_dtype),
            grid=grid,
            in_specs=[
                pl.BlockSpec((tile_m, LANES), lambda i: (i, 0)),
                pl.BlockSpec((LANES, pack), lambda i: (0, 0)),
            ],
            out_specs=pl.BlockSpec((tile_m, pack), lambda i: (i, 0)),
            compiler_params=cparams,
            cost_estimate=cost,
        )(x2, sel)
        # Rows/columns mapping to capsule indices >= R hold garbage from the
        # ragged last block / tail padding; they are discarded here.
        return out.reshape(-1)[:R].reshape(lead_shape)

    # ---- generic fallback (D does not divide the 128-lane vreg) ----------
    # Budget ~4 MiB per input buffer, accounting for lane padding to 128.
    bytes_per_row = _round_up(D, LANES) * 4
    rows_budget = max(8, ((4 * 1024 * 1024) // bytes_per_row) // 8 * 8)
    tile_r = min(rows_budget, max(8, _round_up(pl.cdiv(R, 2), 8)))

    x2 = x.reshape(R, D)
    grid = (pl.cdiv(R, tile_r),)                   # ragged last block is fine

    cost = pl.CostEstimate(
        flops=2 * R * D,
        transcendentals=R,
        bytes_accessed=R * D * itemsize + R * itemsize,
    )

    out = pl.pallas_call(
        _caps_len_rowtile_kernel,
        out_shape=jax.ShapeDtypeStruct((R, 1), out_dtype),
        grid=grid,
        in_specs=[pl.BlockSpec((tile_r, D), lambda i: (i, 0))],
        out_specs=pl.BlockSpec((tile_r, 1), lambda i: (i, 0)),
        compiler_params=cparams,
        cost_estimate=cost,
    )(x2)
    return out.reshape(lead_shape)


if __name__ == "__main__":
    key = jax.random.PRNGKey(0)

    # batch=2, num_caps=8, caps_dim=16 (last dim is reduced) -> packed path,
    # R*D = 256 is a multiple of 128 so no padding copy at all.
    x = jax.random.normal(key, (2, 8, 16), dtype=jnp.float32)
    y = caps_len(x)
    jax.block_until_ready(y)
    y_ref = jnp.sqrt(jnp.sum(x.astype(jnp.float32) ** 2, axis=-1) + EPS)
    assert y.shape == (2, 8)
    assert jnp.allclose(y, y_ref, rtol=1e-5, atol=1e-5)

    # Packed path with R*D % 128 != 0 (exercises the small tail pad + ragged block).
    x1 = jax.random.normal(jax.random.PRNGKey(2), (3, 5, 16), dtype=jnp.float32)
    y1 = caps_len(x1)
    jax.block_until_ready(y1)
    y1_ref = jnp.sqrt(jnp.sum(x1 ** 2, axis=-1) + EPS)
    assert y1.shape == (3, 5)
    assert jnp.allclose(y1, y1_ref, rtol=1e-5, atol=1e-5)

    # Generic fallback path (caps_dim that doesn't divide 128).
    x2 = jax.random.normal(jax.random.PRNGKey(1), (2, 8, 24), dtype=jnp.float32)
    y2 = caps_len(x2)
    jax.block_until_ready(y2)
    y2_ref = jnp.sqrt(jnp.sum(x2 ** 2, axis=-1) + EPS)
    assert y2.shape == (2, 8)
    assert jnp.allclose(y2, y2_ref, rtol=1e-5, atol=1e-5)

    print("KERNEL_OK")
</pallas_src>

<mosaic_0001>
module attributes {stable_mosaic.version = 11 : i64} {
  func.func @_caps_len_packed_kernel(%arg0: i32, %arg1: memref<8x128xf32, #tpu.memory_space<vmem>>, %arg2: memref<128x8xbf16, #tpu.memory_space<vmem>>, %arg3: memref<8x8xf32, #tpu.memory_space<vmem>>) attributes {dimension_semantics = [#tpu.dimension_semantics<parallel>], iteration_bounds = array<i64: 1>, scalar_prefetch = 0 : i64, scratch_operands = 0 : i64, tpu.core_type = #tpu.core_type<tc>, window_params = [{transform_indices = @transform_0, window_bounds = array<i64: 8, 128>}, {pipeline_mode = #tpu.pipeline_mode<synchronous>, transform_indices = @transform_1, window_bounds = array<i64: 128, 8>}, {transform_indices = @transform_2, window_bounds = array<i64: 8, 8>}]} {
    %c0 = arith.constant 0 : index
    %c0_0 = arith.constant 0 : index
    %0 = vector.load %arg1[%c0, %c0_0] : memref<8x128xf32, #tpu.memory_space<vmem>>, vector<8x128xf32>
    %1 = arith.mulf %0, %0 : vector<8x128xf32>
    %2 = arith.truncf %1 : vector<8x128xf32> to vector<8x128xbf16>
    %3 = arith.extf %2 : vector<8x128xbf16> to vector<8x128xf32>
    %4 = arith.subf %1, %3 : vector<8x128xf32>
    %5 = arith.truncf %4 : vector<8x128xf32> to vector<8x128xbf16>
    %c0_1 = arith.constant 0 : index
    %c0_2 = arith.constant 0 : index
    %6 = vector.load %arg2[%c0_1, %c0_2] : memref<128x8xbf16, #tpu.memory_space<vmem>>, vector<128x8xbf16>
    %cst = arith.constant dense<0.000000e+00> : vector<8x8xf32>
    %7 = tpu.matmul %2, %6, %cst {dimension_numbers = #tpu.dot_dimension_numbers<[1], [0], [0], [1], [0, 0, 1, 1], [], []>} : vector<8x128xbf16>, vector<128x8xbf16>, vector<8x8xf32> -> vector<8x8xf32>
    %cst_3 = arith.constant dense<0.000000e+00> : vector<8x8xf32>
    %8 = tpu.matmul %5, %6, %cst_3 {dimension_numbers = #tpu.dot_dimension_numbers<[1], [0], [0], [1], [0, 0, 1, 1], [], []>} : vector<8x128xbf16>, vector<128x8xbf16>, vector<8x8xf32> -> vector<8x8xf32>
    %9 = arith.addf %7, %8 : vector<8x8xf32>
    %cst_4 = arith.constant 1.000000e-07 : f32
    %10 = vector.broadcast %cst_4 : f32 to vector<8x8xf32>
    %11 = arith.addf %9, %10 : vector<8x8xf32>
    %12 = math.sqrt %11 : vector<8x8xf32>
    %c0_5 = arith.constant 0 : index
    %c0_6 = arith.constant 0 : index
    %13 = vector.load %arg3[%c0_5, %c0_6] : memref<8x8xf32, #tpu.memory_space<vmem>>, vector<8x8xf32>
    tpu.vector_store %arg3[%c0_5, %c0_6], %12 {strides = array<i32>} : memref<8x8xf32, #tpu.memory_space<vmem>>, vector<8x8xf32>,
    return
  }
  func.func @transform_0(%arg0: i32) -> (i32, i32) {
    %c0_i32 = arith.constant 0 : i32
    %c0_i32_0 = arith.constant 0 : i32
    return %arg0, %c0_i32 : i32, i32
  }
  func.func @transform_1(%arg0: i32) -> (i32, i32) {
    %c0_i32 = arith.constant 0 : i32
    %c0_i32_0 = arith.constant 0 : i32
    %c0_i32_1 = arith.constant 0 : i32
    return %c0_i32, %c0_i32_0 : i32, i32
  }
  func.func @transform_2(%arg0: i32) -> (i32, i32) {
    %c0_i32 = arith.constant 0 : i32
    %c0_i32_0 = arith.constant 0 : i32
    return %arg0, %c0_i32 : i32, i32
  }
}

</mosaic_0001>

<llo_original>
// kernel: tpu_custom_call.1
$region0: #{tpu_custom_call.1}
  #allocation0 [shape = 'u32[]', space=smem, size = 0x4, offset = 0x4, fixed_abs, tag = 'smem constant byte address 0x4 - core index']
  #allocation1 [shape = 'u32[144,128]{1,0:T(1,128)}', space=vmem, size = 0x12000, scoped, tag = 'internal scratch']
  %s0 = inlined_call_operand.vmem [shape: f32[2,128], index: 0, kind: input, shape index: {}]
  %s1 = inlined_call_operand.vmem [shape: bf16[128,8], index: 1, kind: input, shape index: {}]
  %s2 = inlined_call_operand.hbm [shape: f32[2,8], index: 2, kind: output, shape index: {}]
  %s3 = sld [smem:[#allocation0]]
  $region18: #{tpu_custom_call.1} parent=0
    _
  %s5 = ssub.s32 1, %s3
  %s6 = scalar_select 0, %s5, %s3
  $region1: #{tpu_custom_call.1} parent=0
    #allocation2 [shape = 'u8[4096]{0}', space=vmem, size = 0x1000, scoped, tag = 'output window, operand 0, single buffered']
    #allocation3 [shape = 's32[1]{0}', space=sflag, size = 0x4, scoped, tag = 'scoped memory for tpu_custom_call.1']
    %7 = vsyncpa [#allocation3], 0
    // Predicated region
    $region2: #{tpu_custom_call.1} parent=1 // pred_check
      _
    $region3: #{tpu_custom_call.1} parent=1 // pred_check_branch
      %9 = sbr.rel (0) target = $region5
    $region4: #{tpu_custom_call.1} parent=1 // pred_region
      _
    $region5: #{tpu_custom_call.1} parent=1 // pred_fallthru
      _
    // Predicated region
    $region6: #{tpu_custom_call.1} parent=1 // pred_check
      _
    $region7: #{tpu_custom_call.1} parent=1 // pred_check_branch
      %11 = sbr.rel (0) target = $region9
    $region8: #{tpu_custom_call.1} parent=1 // pred_region
      _
    $region9: #{tpu_custom_call.1} parent=1 // pred_fallthru
      _
    %v13 = vld [vmem:[%s0] sm:$0xff]
    %v14 = vmul.f32 %v13, %v13
    %v15 = vpack.c.bf16 %v14, %v14
    %v16 = vunpack.c.l.bf16 %v15
    %v17 = vsub.f32 %v14, %v16
    %v18 = vpack.c.bf16 %v17, %v17
    %v19 = vld [vmem:[%s1] sm:$0xf]
    %v20 = vld [vmem:[%s1 + $0x4] sm:$0xf]
    %v21 = vld [vmem:[%s1 + $0x8] sm:$0xf]
    %v22 = vld [vmem:[%s1 + $0xc] sm:$0xf]
    %v23 = vld [vmem:[%s1 + $0x10] sm:$0xf]
    %v24 = vld [vmem:[%s1 + $0x14] sm:$0xf]
    %v25 = vld [vmem:[%s1 + $0x18] sm:$0xf]
    %v26 = vld [vmem:[%s1 + $0x1c] sm:$0xf]
    %v27 = vld [vmem:[%s1 + $0x20] sm:$0xf]
    %v28 = vld [vmem:[%s1 + $0x24] sm:$0xf]
    %v29 = vld [vmem:[%s1 + $0x28] sm:$0xf]
    %v30 = vld [vmem:[%s1 + $0x2c] sm:$0xf]
    %v31 = vld [vmem:[%s1 + $0x30] sm:$0xf]
    %v32 = vld [vmem:[%s1 + $0x34] sm:$0xf]
    %v33 = vld [vmem:[%s1 + $0x38] sm:$0xf]
    %v34 = vld [vmem:[%s1 + $0x3c] sm:$0xf]
    %v51 = vunpack.c.l.b16 %v19
    %v52 = vunpack.c.l.b16 %v20
    %v53 = vunpack.c.l.b16 %v21
    %v54 = vunpack.c.l.b16 %v22
    %v55 = vunpack.c.l.b16 %v23
    %v56 = vunpack.c.l.b16 %v24
    %v57 = vunpack.c.l.b16 %v25
    %v58 = vunpack.c.l.b16 %v26
    %v59 = vunpack.c.l.b16 %v27
    %v60 = vunpack.c.l.b16 %v28
    %v61 = vunpack.c.l.b16 %v29
    %v62 = vunpack.c.l.b16 %v30
    %v63 = vunpack.c.l.b16 %v31
    %v64 = vunpack.c.l.b16 %v32
    %v65 = vunpack.c.l.b16 %v33
    %v66 = vunpack.c.l.b16 %v34
    %v67 = vpack.c.b16 %v52, %v51
    %v68 = vpack.c.b16 %v54, %v53
    %v69 = vpack.c.b16 %v56, %v55
    %v70 = vpack.c.b16 %v58, %v57
    %v71 = vpack.c.b16 %v60, %v59
    %v72 = vpack.c.b16 %v62, %v61
    %v73 = vpack.c.b16 %v64, %v63
    %v74 = vpack.c.b16 %v66, %v65
    %83 = vmatprep.subr.bf16.mxu0 0
    %84 = vmatpush1.bf16.msra.mxu0 %v67
    %85 = vmatprep.subr.bf16.mxu0 0
    %86 = vmatpush1.bf16.msra.mxu0 %v68
    %87 = vmatprep.subr.bf16.mxu0 0
    %88 = vmatpush1.bf16.msra.mxu0 %v69
    %89 = vmatprep.subr.bf16.mxu0 0
    %90 = vmatpush1.bf16.msra.mxu0 %v70
    %91 = vmatprep.subr.bf16.mxu0 0
    %92 = vmatpush1.bf16.msra.mxu0 %v71
    %93 = vmatprep.subr.bf16.mxu0 0
    %94 = vmatpush1.bf16.msra.mxu0 %v72
    %95 = vmatprep.subr.bf16.mxu0 0
    %96 = vmatpush1.bf16.msra.mxu0 %v73
    %97 = vmatprep.subr.bf16.mxu0 0
    %98 = vmatpush1.bf16.msra.mxu0 %v74
    %99 = vmatprep.subr.bf16.mxu0 0
    %100 = vmatpush1.bf16.msra.mxu0 0
    %101 = vmatprep.subr.bf16.mxu0 0
    %102 = vmatpush1.bf16.msra.mxu0 0
    %103 = vmatprep.subr.bf16.mxu0 0
    %104 = vmatpush1.bf16.msra.mxu0 0
    %105 = vmatprep.subr.bf16.mxu0 0
    %106 = vmatpush1.bf16.msra.mxu0 0
    %107 = vmatprep.subr.bf16.mxu0 0
    %108 = vmatpush1.bf16.msra.mxu0 0
    %109 = vmatprep.subr.bf16.mxu0 0
    %110 = vmatpush1.bf16.msra.mxu0 0
    %111 = vmatprep.subr.bf16.mxu0 0
    %112 = vmatpush1.bf16.msra.mxu0 0
    %113 = vmatprep.subr.bf16.mxu0 0
    %114 = vmatpush1.bf16.msra.mxu0 0
    %115 = vmatprep.mubr.bf16.mxu0 0
    %116 = vmatmul.mubr.bf16.gmra.mrb[0].mxu0 %v18
    %v117 = vpop.f32.mrb[0].mxu0
    %v118 = vadd.f32 0.0, %v117
    %v119 = vpop.f32.mrb[0].mxu0
    %v120 = vpop.f32.mrb[0].mxu0
    %v121 = vpop.f32.mrb[0].mxu0
    %122 = vdwg.mxu0
    %123 = vmatprep.subr.bf16.mxu0 0
    %124 = vmatpush1.bf16.msra.mxu0 %v67
    %125 = vmatprep.subr.bf16.mxu0 0
    %126 = vmatpush1.bf16.msra.mxu0 %v68
    %127 = vmatprep.subr.bf16.mxu0 0
    %128 = vmatpush1.bf16.msra.mxu0 %v69
    %129 = vmatprep.subr.bf16.mxu0 0
    %130 = vmatpush1.bf16.msra.mxu0 %v70
    %131 = vmatprep.subr.bf16.mxu0 0
    %132 = vmatpush1.bf16.msra.mxu0 %v71
    %133 = vmatprep.subr.bf16.mxu0 0
    %134 = vmatpush1.bf16.msra.mxu0 %v72
    %135 = vmatprep.subr.bf16.mxu0 0
    %136 = vmatpush1.bf16.msra.mxu0 %v73
    %137 = vmatprep.subr.bf16.mxu0 0
    %138 = vmatpush1.bf16.msra.mxu0 %v74
    %139 = vmatprep.subr.bf16.mxu0 0
    %140 = vmatpush1.bf16.msra.mxu0 0
    %141 = vmatprep.subr.bf16.mxu0 0
    %142 = vmatpush1.bf16.msra.mxu0 0
    %143 = vmatprep.subr.bf16.mxu0 0
    %144 = vmatpush1.bf16.msra.mxu0 0
    %145 = vmatprep.subr.bf16.mxu0 0
    %146 = vmatpush1.bf16.msra.mxu0 0
    %147 = vmatprep.subr.bf16.mxu0 0
    %148 = vmatpush1.bf16.msra.mxu0 0
    %149 = vmatprep.subr.bf16.mxu0 0
    %150 = vmatpush1.bf16.msra.mxu0 0
    %151 = vmatprep.subr.bf16.mxu0 0
    %152 = vmatpush1.bf16.msra.mxu0 0
    %153 = vmatprep.subr.bf16.mxu0 0
    %154 = vmatpush1.bf16.msra.mxu0 0
    %155 = vmatprep.mubr.bf16.mxu0 0
    %156 = vmatmul.mubr.bf16.gmra.mrb[0].mxu0 %v15
    %v157 = vpop.f32.mrb[0].mxu0
    %v158 = vadd.f32 %v118, %v157
    %v159 = vpop.f32.mrb[0].mxu0
    %v160 = vpop.f32.mrb[0].mxu0
    %v161 = vpop.f32.mrb[0].mxu0
    %162 = vdwg.mxu0
    %v163 = vadd.f32 %v158, 1e-07
    %v164 = vrsqrt.pop %v163
    %v165 = vmul.f32 %v163, %v164
    %vm166 = vcmp.eq.f32.partialorder %v163, inf
    %v167 = vsel %vm166, %v163, %v165
    %vm168 = vcmp.eq.f32.partialorder %v163, 0.0
    %v169 = vand.u32 %v163, 2147483648
    %v170 = vsel %vm168, %v169, %v167
    %vm171 = vcmask 64512
    %172 = vst.msk [vmem:[#allocation2] sm:$0xff] %vm171, %v170
    // Predicated region
    $region10: #{tpu_custom_call.1} parent=1 // pred_check
      _
    $region11: #{tpu_custom_call.1} parent=1 // pred_check_branch
      %174 = sbr.rel (0) target = $region13
    $region12: #{tpu_custom_call.1} parent=1 // pred_region
      %s176 = ssub.s32 128, 32
      %177 = vsyncadd [#allocation3], %s176
      %s178 = sshll.u32 [#allocation2], 4
      %s179 = int_to_ptr.vmem [resolvable:$true] %s178
      %184 = dma.vmem_to_hbm [thread:$0]  %s179, 32, %s2, [#allocation3], 32, 32, 2
    $region13: #{tpu_custom_call.1} parent=1 // pred_fallthru
      _
    // Predicated region
    $region14: #{tpu_custom_call.1} parent=1 // pred_check
      _
    $region15: #{tpu_custom_call.1} parent=1 // pred_check_branch
      %186 = sbr.rel (0) target = $region17
    $region16: #{tpu_custom_call.1} parent=1 // pred_region
      %187 = dma.done [#allocation3], 128
    $region17: #{tpu_custom_call.1} parent=1 // pred_fallthru
      _
    %188 = vsyncpa [#allocation3], 1

</llo_original>
